<compile_context>
chip_gen: v7x
topology: tpu7x:2x2x1
jax: 0.10.0
libtpu: 0.0.40
codegen_flags: <defaults>
</compile_context>

<pallas_src>
import functools

import jax
import jax.numpy as jnp
from jax import lax
from jax.experimental import pallas as pl
from jax.experimental.pallas import tpu as pltpu

LANES = 128
SUBLANES = 8
TARGET_TILE_ROWS = 8192          # 4 MiB per f32 input per grid step
MAX_CHUNK_ROWS = 512             # compute-chunk rows inside a tile (256 KiB temporaries)
VMEM_LIMIT_BYTES = 32 * 1024 * 1024


def _round_up(x, m):
    return ((x + m - 1) // m) * m


def _pick_chunk_rows(tile_rows):
    # Largest divisor of tile_rows that is <= MAX_CHUNK_ROWS (tile_rows is a
    # multiple of 8, so 8 always works).
    for cand in (MAX_CHUNK_ROWS, 256, 128, 64, 32, 16, 8):
        if cand <= tile_rows and tile_rows % cand == 0:
            return cand
    return tile_rows


def _focal_kernel(pred_ref, gt_ref, out_ref, *, rows, tile_rows, chunk_rows,
                  tiles_per_split, full_tiles, need_mask):
    c = pl.program_id(0)          # TensorCore split (parallel axis)
    j = pl.program_id(1)          # reduction step within the split (arbitrary)
    tile_idx = c * tiles_per_split + j
    n_chunks = tile_rows // chunk_rows

    @pl.when(j == 0)
    def _init():
        out_ref[...] = jnp.zeros_like(out_ref)

    def tile_sums(valid_rows):
        # valid_rows: None (tile fully in bounds) or a traced int32 count of
        # valid rows in this tile (<= 0 for duplicated / clamped tiles).
        def body(i, carry):
            loss_acc, pos_acc = carry
            r0 = pl.multiple_of(i * chunk_rows, chunk_rows)
            pred = pred_ref[pl.ds(r0, chunk_rows), :].astype(jnp.float32)
            gt = gt_ref[pl.ds(r0, chunk_rows), :].astype(jnp.float32)

            pos = gt == 1.0
            valid = gt <= 1.0            # == pos | (gt < 1); NaN / gt > 1 excluded
            if valid_rows is not None:   # only emitted for boundary tiles
                row = r0 + lax.broadcasted_iota(jnp.int32, (chunk_rows, LANES), 0)
                inb = row < valid_rows
                pos = jnp.logical_and(pos, inb)
                valid = jnp.logical_and(valid, inb)

            # One transcendental per element; shared select feeds log and weight.
            sel = jnp.where(pos, pred, 1.0 - pred)
            lg = jnp.log(sel)
            neg_w = jnp.square(jnp.square(1.0 - gt))                 # (1 - gt)^4
            w = jnp.square(1.0 - sel) * jnp.where(pos, 1.0, neg_w)
            contrib = jnp.where(valid, lg * w, 0.0)    # where() drops NaN/Inf from masked rows
            pos_f = pos.astype(jnp.float32)

            # Cross-vreg partial reduction only -> pure VPU adds, no XLU.
            k = chunk_rows // SUBLANES
            loss_acc = loss_acc + jnp.sum(contrib.reshape(k, SUBLANES, LANES), axis=0)
            pos_acc = pos_acc + jnp.sum(pos_f.reshape(k, SUBLANES, LANES), axis=0)
            return loss_acc, pos_acc

        zero = jnp.zeros((SUBLANES, LANES), jnp.float32)
        return lax.fori_loop(0, n_chunks, body, (zero, zero))

    def accumulate(valid_rows):
        loss_p, pos_p = tile_sums(valid_rows)
        out_ref[0, 0, :, :] = out_ref[0, 0, :, :] + loss_p
        out_ref[0, 1, :, :] = out_ref[0, 1, :, :] + pos_p

    if need_mask:
        is_partial = tile_idx >= full_tiles

        @pl.when(jnp.logical_not(is_partial))
        def _fast():
            accumulate(None)

        @pl.when(is_partial)
        def _masked():
            accumulate(rows - tile_idx * tile_rows)
    else:
        accumulate(None)


def _tail_sums(pred_t, gt_t):
    """Pure-JAX loss_sum / num_pos for the <128-element ragged tail."""
    pred_t = pred_t.astype(jnp.float32)
    gt_t = gt_t.astype(jnp.float32)
    pos = gt_t == 1.0
    neg = gt_t < 1.0
    neg_w = jnp.square(jnp.square(1.0 - gt_t))
    pos_l = jnp.where(pos, jnp.log(pred_t) * jnp.square(1.0 - pred_t), 0.0)
    neg_l = jnp.where(neg, jnp.log(1.0 - pred_t) * jnp.square(pred_t) * neg_w, 0.0)
    return jnp.sum(pos_l) + jnp.sum(neg_l), jnp.sum(pos.astype(jnp.float32))


def focal_loss(pred, gt, *, target_tile_rows=TARGET_TILE_ROWS):
    """CornerNet modified focal loss.  pred, gt: (B, C, H, W) floats (NCHW)."""
    assert pred.shape == gt.shape

    def _keep(x):
        # Feed bf16 / f32 through unchanged (cast in-kernel); anything else -> f32.
        return x if x.dtype in (jnp.float32, jnp.bfloat16) else x.astype(jnp.float32)

    pred_f = _keep(pred).reshape(-1)
    gt_f = _keep(gt).reshape(-1)
    n = pred_f.shape[0]

    rows = n // LANES
    n_main = rows * LANES
    rem = n - n_main

    # Ragged tail (< 128 elements): summed directly in the wrapper so the main
    # slab needs no padding / concatenation (zero extra HBM pass when n%128==0).
    if rem:
        tail_loss, tail_pos = _tail_sums(pred_f[n_main:], gt_f[n_main:])
    else:
        tail_loss = jnp.float32(0.0)
        tail_pos = jnp.float32(0.0)

    if rows == 0:
        loss_sum, num_pos = tail_loss, tail_pos
    else:
        pred_2d = pred_f[:n_main].reshape(rows, LANES)
        gt_2d = gt_f[:n_main].reshape(rows, LANES)

        tile_rows = min(target_tile_rows, _round_up(rows, SUBLANES))
        chunk_rows = _pick_chunk_rows(tile_rows)
        num_tiles = pl.cdiv(rows, tile_rows)
        # Unconditional 2-way TensorCore split whenever there are >= 2 tiles.
        num_splits = 2 if num_tiles >= 2 else 1
        tiles_per_split = pl.cdiv(num_tiles, num_splits)
        full_tiles = rows // tile_rows
        need_mask = (num_splits * tiles_per_split * tile_rows) != rows

        kernel = functools.partial(
            _focal_kernel, rows=rows, tile_rows=tile_rows,
            chunk_rows=chunk_rows, tiles_per_split=tiles_per_split,
            full_tiles=full_tiles, need_mask=need_mask)

        last_tile = num_tiles - 1
        clamp = num_splits * tiles_per_split > num_tiles

        def in_map(c, j):
            t = c * tiles_per_split + j
            if clamp:  # duplicated trailing tile -> re-read last real tile (fully masked in-kernel)
                t = jnp.minimum(t, last_tile)
            return (t, 0)

        tile_spec = pl.BlockSpec((tile_rows, LANES), in_map)
        out_spec = pl.BlockSpec((1, 2, SUBLANES, LANES), lambda c, j: (c, 0, 0, 0))

        partials = pl.pallas_call(
            kernel,
            out_shape=jax.ShapeDtypeStruct(
                (num_splits, 2, SUBLANES, LANES), jnp.float32),
            grid_spec=pltpu.PrefetchScalarGridSpec(
                num_scalar_prefetch=0,
                grid=(num_splits, tiles_per_split),
                in_specs=[tile_spec, tile_spec],
                out_specs=out_spec),
            compiler_params=pltpu.CompilerParams(
                dimension_semantics=("parallel", "arbitrary"),
                vmem_limit_bytes=VMEM_LIMIT_BYTES),
        )(pred_2d, gt_2d)

        loss_sum = jnp.sum(partials[:, 0]) + tail_loss
        num_pos = jnp.sum(partials[:, 1]) + tail_pos

    # num_pos == 0 implies pos_loss_sum == 0, so -loss_sum == -neg_loss_sum.
    return jnp.where(num_pos == 0.0, -loss_sum,
                     -loss_sum / jnp.maximum(num_pos, 1.0))


def focal_loss_ref(pred, gt):
    """Pure-JAX reference mirroring the PyTorch _neg_loss exactly."""
    pred = pred.astype(jnp.float32)
    gt = gt.astype(jnp.float32)
    pos_inds = (gt == 1.0).astype(jnp.float32)
    neg_inds = (gt < 1.0).astype(jnp.float32)
    neg_weights = jnp.power(1.0 - gt, 4)
    pos_loss = jnp.log(pred) * jnp.power(1.0 - pred, 2) * pos_inds
    neg_loss = jnp.log(1.0 - pred) * jnp.power(pred, 2) * neg_weights * neg_inds
    num_pos = pos_inds.sum()
    pos_s = pos_loss.sum()
    neg_s = neg_loss.sum()
    return jnp.where(num_pos == 0.0, -neg_s,
                     -(pos_s + neg_s) / jnp.maximum(num_pos, 1.0))


if __name__ == "__main__":
    key = jax.random.PRNGKey(0)
    k1, k2, k3, k4 = jax.random.split(key, 4)

    # Primary small NCHW heatmap shape.
    B, C, H, W = 2, 4, 16, 16
    pred = jax.nn.sigmoid(jax.random.normal(k1, (B, C, H, W), jnp.float32))
    gt = jax.random.uniform(k2, (B, C, H, W), jnp.float32)
    gt = jnp.where(gt > 0.97, 1.0, gt * 0.9)   # gaussian-ish with exact 1.0 peaks

    loss = jax.block_until_ready(focal_loss(pred, gt))
    ref = jax.block_until_ready(focal_loss_ref(pred, gt))
    assert jnp.allclose(loss, ref, rtol=1e-4, atol=1e-4), (loss, ref)

    # Ragged shape: exercises the in-kernel partial-tile mask and the
    # wrapper-side <128-element tail path.
    B2, C2, H2, W2 = 2, 3, 17, 19
    pred2 = jax.nn.sigmoid(jax.random.normal(k3, (B2, C2, H2, W2), jnp.float32))
    gt2 = jax.random.uniform(k4, (B2, C2, H2, W2), jnp.float32)
    gt2 = jnp.where(gt2 > 0.97, 1.0, gt2 * 0.9)

    loss2 = jax.block_until_ready(focal_loss(pred2, gt2))
    ref2 = jax.block_until_ready(focal_loss_ref(pred2, gt2))
    assert jnp.allclose(loss2, ref2, rtol=1e-4, atol=1e-4), (loss2, ref2)

    print("KERNEL_OK")
</pallas_src>

<mosaic_0001>
module attributes {stable_mosaic.version = 11 : i64} {
  func.func @_focal_kernel(%arg0: i32, %arg1: i32, %arg2: memref<16x128xf32, #tpu.memory_space<vmem>>, %arg3: memref<16x128xf32, #tpu.memory_space<vmem>>, %arg4: memref<1x2x8x128xf32, #tpu.memory_space<vmem>>) attributes {dimension_semantics = [#tpu.dimension_semantics<parallel>, #tpu.dimension_semantics<arbitrary>], iteration_bounds = array<i64: 1, 1>, scalar_prefetch = 0 : i64, scratch_operands = 0 : i64, tpu.core_type = #tpu.core_type<tc>, window_params = [{transform_indices = @transform_0, window_bounds = array<i64: 16, 128>}, {transform_indices = @transform_1, window_bounds = array<i64: 16, 128>}, {transform_indices = @transform_2, window_bounds = array<i64: 1, 2, 8, 128>}]} {
    %c0_i32 = arith.constant 0 : i32
    %0 = arith.cmpi eq, %arg1, %c0_i32 : i32
    %1 = arith.extui %0 : i1 to i32
    %c0_i32_0 = arith.constant 0 : i32
    %2 = arith.cmpi ne, %1, %c0_i32_0 : i32
    scf.if %2 {
      %cst_27 = arith.constant 0.000000e+00 : f32
      %51 = vector.broadcast %cst_27 : f32 to vector<1x2x8x128xf32>
      %c0_28 = arith.constant 0 : index
      %c0_29 = arith.constant 0 : index
      %c0_30 = arith.constant 0 : index
      %c0_31 = arith.constant 0 : index
      %52 = vector.load %arg4[%c0_28, %c0_29, %c0_30, %c0_31] : memref<1x2x8x128xf32, #tpu.memory_space<vmem>>, vector<1x2x8x128xf32>
      tpu.vector_store %arg4[%c0_28, %c0_29, %c0_30, %c0_31], %51 {strides = array<i32>} : memref<1x2x8x128xf32, #tpu.memory_space<vmem>>, vector<1x2x8x128xf32>,
    } else {
    }
    %cst = arith.constant 0.000000e+00 : f32
    %3 = vector.broadcast %cst : f32 to vector<8x128xf32>
    %c0_i32_1 = arith.constant 0 : i32
    %c16_i32 = arith.constant 16 : i32
    %4 = arith.muli %c0_i32_1, %c16_i32 : i32
    %5 = tpu.assume_multiple %4, 16 : i32
    %6 = arith.index_cast %5 : i32 to index
    %c0 = arith.constant 0 : index
    %7 = vector.load %arg2[%6, %c0] : memref<16x128xf32, #tpu.memory_space<vmem>>, vector<16x128xf32>
    %8 = arith.index_cast %5 : i32 to index
    %c0_2 = arith.constant 0 : index
    %9 = vector.load %arg3[%8, %c0_2] : memref<16x128xf32, #tpu.memory_space<vmem>>, vector<16x128xf32>
    %cst_3 = arith.constant 1.000000e+00 : f32
    %10 = vector.broadcast %cst_3 : f32 to vector<16x128xf32>
    %11 = arith.cmpf oeq, %9, %10 : vector<16x128xf32>
    %cst_4 = arith.constant 1.000000e+00 : f32
    %12 = vector.broadcast %cst_4 : f32 to vector<16x128xf32>
    %13 = arith.cmpf ole, %9, %12 : vector<16x128xf32>
    %cst_5 = arith.constant 1.000000e+00 : f32
    %14 = vector.broadcast %cst_5 : f32 to vector<16x128xf32>
    %15 = arith.subf %14, %7 : vector<16x128xf32>
    %16 = arith.select %11, %7, %15 : vector<16x128xi1>, vector<16x128xf32>
    %17 = math.log %16 : vector<16x128xf32>
    %cst_6 = arith.constant 1.000000e+00 : f32
    %18 = vector.broadcast %cst_6 : f32 to vector<16x128xf32>
    %19 = arith.subf %18, %9 : vector<16x128xf32>
    %20 = arith.mulf %19, %19 : vector<16x128xf32>
    %21 = arith.mulf %20, %20 : vector<16x128xf32>
    %cst_7 = arith.constant 1.000000e+00 : f32
    %22 = vector.broadcast %cst_7 : f32 to vector<16x128xf32>
    %23 = arith.subf %22, %16 : vector<16x128xf32>
    %24 = arith.mulf %23, %23 : vector<16x128xf32>
    %cst_8 = arith.constant 1.000000e+00 : f32
    %25 = vector.broadcast %cst_8 : f32 to vector<16x128xf32>
    %26 = arith.select %11, %25, %21 : vector<16x128xi1>, vector<16x128xf32>
    %27 = arith.mulf %24, %26 : vector<16x128xf32>
    %28 = arith.mulf %17, %27 : vector<16x128xf32>
    %cst_9 = arith.constant 0.000000e+00 : f32
    %29 = vector.broadcast %cst_9 : f32 to vector<16x128xf32>
    %30 = arith.select %13, %28, %29 : vector<16x128xi1>, vector<16x128xf32>
    %31 = arith.extui %11 : vector<16x128xi1> to vector<16x128xi32>
    %32 = arith.sitofp %31 : vector<16x128xi32> to vector<16x128xf32>
    %33 = vector.shape_cast %30 : vector<16x128xf32> to vector<2x8x128xf32>
    %cst_10 = arith.constant dense<0.000000e+00> : vector<8x128xf32>
    %34 = vector.multi_reduction <add>, %33, %cst_10 [0] : vector<2x8x128xf32> to vector<8x128xf32>
    %35 = arith.addf %3, %34 : vector<8x128xf32>
    %36 = vector.shape_cast %32 : vector<16x128xf32> to vector<2x8x128xf32>
    %cst_11 = arith.constant dense<0.000000e+00> : vector<8x128xf32>
    %37 = vector.multi_reduction <add>, %36, %cst_11 [0] : vector<2x8x128xf32> to vector<8x128xf32>
    %38 = arith.addf %3, %37 : vector<8x128xf32>
    %c1_i32 = arith.constant 1 : i32
    %c0_12 = arith.constant 0 : index
    %c0_13 = arith.constant 0 : index
    %c0_14 = arith.constant 0 : index
    %c0_15 = arith.constant 0 : index
    %39 = vector.load %arg4[%c0_12, %c0_13, %c0_14, %c0_15] : memref<1x2x8x128xf32, #tpu.memory_space<vmem>>, vector<1x1x8x128xf32>
    %40 = vector.shape_cast %39 : vector<1x1x8x128xf32> to vector<8x128xf32>
    %41 = arith.addf %40, %35 : vector<8x128xf32>
    %c0_16 = arith.constant 0 : index
    %c0_17 = arith.constant 0 : index
    %c0_18 = arith.constant 0 : index
    %c0_19 = arith.constant 0 : index
    %42 = vector.load %arg4[%c0_16, %c0_17, %c0_18, %c0_19] : memref<1x2x8x128xf32, #tpu.memory_space<vmem>>, vector<1x1x8x128xf32>
    %43 = vector.shape_cast %42 : vector<1x1x8x128xf32> to vector<8x128xf32>
    %44 = vector.shape_cast %41 : vector<8x128xf32> to vector<1x1x8x128xf32>
    tpu.vector_store %arg4[%c0_16, %c0_17, %c0_18, %c0_19], %44 {strides = array<i32>} : memref<1x2x8x128xf32, #tpu.memory_space<vmem>>, vector<1x1x8x128xf32>,
    %c0_20 = arith.constant 0 : index
    %c1 = arith.constant 1 : index
    %c0_21 = arith.constant 0 : index
    %c0_22 = arith.constant 0 : index
    %45 = vector.load %arg4[%c0_20, %c1, %c0_21, %c0_22] : memref<1x2x8x128xf32, #tpu.memory_space<vmem>>, vector<1x1x8x128xf32>
    %46 = vector.shape_cast %45 : vector<1x1x8x128xf32> to vector<8x128xf32>
    %47 = arith.addf %46, %38 : vector<8x128xf32>
    %c0_23 = arith.constant 0 : index
    %c1_24 = arith.constant 1 : index
    %c0_25 = arith.constant 0 : index
    %c0_26 = arith.constant 0 : index
    %48 = vector.load %arg4[%c0_23, %c1_24, %c0_25, %c0_26] : memref<1x2x8x128xf32, #tpu.memory_space<vmem>>, vector<1x1x8x128xf32>
    %49 = vector.shape_cast %48 : vector<1x1x8x128xf32> to vector<8x128xf32>
    %50 = vector.shape_cast %47 : vector<8x128xf32> to vector<1x1x8x128xf32>
    tpu.vector_store %arg4[%c0_23, %c1_24, %c0_25, %c0_26], %50 {strides = array<i32>} : memref<1x2x8x128xf32, #tpu.memory_space<vmem>>, vector<1x1x8x128xf32>,
    return
  }
  func.func @transform_0(%arg0: i32, %arg1: i32) -> (i32, i32) {
    %c1_i32 = arith.constant 1 : i32
    %0 = arith.muli %arg0, %c1_i32 : i32
    %1 = arith.addi %0, %arg1 : i32
    %c0_i32 = arith.constant 0 : i32
    %c0_i32_0 = arith.constant 0 : i32
    return %1, %c0_i32 : i32, i32
  }
  func.func @transform_1(%arg0: i32, %arg1: i32) -> (i32, i32) {
    %c1_i32 = arith.constant 1 : i32
    %0 = arith.muli %arg0, %c1_i32 : i32
    %1 = arith.addi %0, %arg1 : i32
    %c0_i32 = arith.constant 0 : i32
    %c0_i32_0 = arith.constant 0 : i32
    return %1, %c0_i32 : i32, i32
  }
  func.func @transform_2(%arg0: i32, %arg1: i32) -> (i32, i32, i32, i32) {
    %c0_i32 = arith.constant 0 : i32
    %c0_i32_0 = arith.constant 0 : i32
    %c0_i32_1 = arith.constant 0 : i32
    %c0_i32_2 = arith.constant 0 : i32
    return %arg0, %c0_i32, %c0_i32_0, %c0_i32_1 : i32, i32, i32, i32
  }
}

</mosaic_0001>

<llo_original>
// kernel: tpu_custom_call.1
$region0: #{tpu_custom_call.1}
  #allocation0 [shape = 'u32[]', space=smem, size = 0x4, offset = 0x4, fixed_abs, tag = 'smem constant byte address 0x4 - core index']
  #allocation1 [shape = 'u32[144,128]{1,0:T(1,128)}', space=vmem, size = 0x12000, scoped, tag = 'internal scratch']
  %s0 = inlined_call_operand.hbm [shape: f32[16,128], index: 0, kind: input, shape index: {}]
  %s1 = inlined_call_operand.hbm [shape: f32[16,128], index: 1, kind: input, shape index: {}]
  %s2 = inlined_call_operand.hbm [shape: f32[1,2,8,128], index: 2, kind: output, shape index: {}]
  %s3 = sld [smem:[#allocation0]]
  $region30: #{tpu_custom_call.1} parent=0
    _
  %s5 = ssub.s32 1, %s3
  %s6 = scalar_select 0, %s5, %s3
  $region1: #{tpu_custom_call.1} parent=0
    #allocation2 [shape = 'u8[8192]{0}', space=vmem, size = 0x2000, scoped, tag = 'input window, operand 0, single buffered']
    #allocation3 [shape = 's32[1]{0}', space=sflag, size = 0x4, scoped, tag = 'scoped memory for tpu_custom_call.1']
    #allocation4 [shape = 's32[1]{0}', space=sflag, size = 0x4, scoped, tag = 'scoped memory for tpu_custom_call.1']
    #allocation5 [shape = 'u8[8192]{0}', space=vmem, size = 0x2000, scoped, tag = 'input window, operand 1, single buffered']
    #allocation6 [shape = 's32[1]{0}', space=sflag, size = 0x4, scoped, tag = 'scoped memory for tpu_custom_call.1']
    #allocation7 [shape = 'u8[8192]{0}', space=vmem, size = 0x2000, scoped, tag = 'output window, operand 0, single buffered']
    %7 = vsyncpa [#allocation3], 0
    %8 = vsyncpa [#allocation6], 0
    %9 = vsyncpa [#allocation4], 0
    // Predicated region
    $region2: #{tpu_custom_call.1} parent=1 // pred_check
      _
    $region3: #{tpu_custom_call.1} parent=1 // pred_check_branch
      %11 = sbr.rel (0) target = $region5
    $region4: #{tpu_custom_call.1} parent=1 // pred_region
      %s12 = sadd.s32 0, 0
      %s13 = smul.u32 2, %s12
      %s15 = ssub.s32 256, 256
      %16 = vsyncadd [#allocation3], %s15
      %s17 = smul.addr %s13, 128
      %s18 = scalar_lea.hbm %s0, %s17
      %s19 = sshll.u32 [#allocation2], 4
      %s20 = int_to_ptr.vmem [resolvable:$true] %s19
      %25 = dma.hbm_to_vmem [thread:$0]  %s18, 256, %s20, [#allocation3], 128, 128, 8
    $region5: #{tpu_custom_call.1} parent=1 // pred_fallthru
      _
    // Predicated region
    $region6: #{tpu_custom_call.1} parent=1 // pred_check
      _
    $region7: #{tpu_custom_call.1} parent=1 // pred_check_branch
      %27 = sbr.rel (0) target = $region9
    $region8: #{tpu_custom_call.1} parent=1 // pred_region
      %s28 = sadd.s32 0, 0
      %s29 = smul.u32 2, %s28
      %s31 = ssub.s32 256, 256
      %32 = vsyncadd [#allocation6], %s31
      %s33 = smul.addr %s29, 128
      %s34 = scalar_lea.hbm %s1, %s33
      %s35 = sshll.u32 [#allocation5], 4
      %s36 = int_to_ptr.vmem [resolvable:$true] %s35
      %41 = dma.hbm_to_vmem [thread:$0]  %s34, 256, %s36, [#allocation6], 128, 128, 8
    $region9: #{tpu_custom_call.1} parent=1 // pred_fallthru
      _
    // Predicated region
    $region10: #{tpu_custom_call.1} parent=1 // pred_check
      _
    $region11: #{tpu_custom_call.1} parent=1 // pred_check_branch
      %43 = sbr.rel (0) target = $region13
    $region12: #{tpu_custom_call.1} parent=1 // pred_region
      %44 = dma.done [#allocation3], 256
    $region13: #{tpu_custom_call.1} parent=1 // pred_fallthru
      _
    // Predicated region
    $region14: #{tpu_custom_call.1} parent=1 // pred_check
      _
    $region15: #{tpu_custom_call.1} parent=1 // pred_check_branch
      %46 = sbr.rel (0) target = $region17
    $region16: #{tpu_custom_call.1} parent=1 // pred_region
      %47 = dma.done [#allocation6], 256
    $region17: #{tpu_custom_call.1} parent=1 // pred_fallthru
      _
    %s48 = sadd.s32 0, 0
    %s49 = smul.u32 2, %s48
    %s50 = sadd.s32 0, 0
    %s51 = smul.u32 2, %s50
    %p52 = scmp.eq.s32.totalorder 0, 0
    // Predicated region
    $region18: #{tpu_custom_call.1} parent=1 // pred_check
      %p53 = pneg %p52
    $region19: #{tpu_custom_call.1} parent=1 // pred_check_branch
      %55 = sbr.rel (%p53) target = $region21
    $region20: #{tpu_custom_call.1} parent=1 // pred_region
      %56 = vst [vmem:[#allocation7] sm:$0xff] 0.0
      %57 = vst [vmem:[#allocation7 + $0x8] sm:$0xff] 0.0
    $region21: #{tpu_custom_call.1} parent=1 // pred_fallthru
      _
    %v58 = vld [vmem:[#allocation2] sm:$0xff]
    %v59 = vld [vmem:[#allocation2 + $0x8] sm:$0xff]
    %v60 = vld [vmem:[#allocation5] sm:$0xff]
    %v61 = vld [vmem:[#allocation5 + $0x8] sm:$0xff]
    %vm62 = vcmp.eq.f32.partialorder %v60, 1.0
    %vm63 = vcmp.eq.f32.partialorder %v61, 1.0
    %vm64 = vcmp.le.f32.partialorder %v60, 1.0
    %vm65 = vcmp.le.f32.partialorder %v61, 1.0
    %v66 = vsub.f32 1.0, %v58
    %v67 = vsub.f32 1.0, %v59
    %v68 = vsel %vm62, %v58, %v66
    %v69 = vsel %vm63, %v59, %v67
    %v70 = vlog2.pop %v68
    %v71 = vmul.f32 %v70, 0.6931472
    %v72 = vlog2.pop %v69
    %v73 = vmul.f32 %v72, 0.6931472
    %v74 = vsub.f32 1.0, %v60
    %v75 = vsub.f32 1.0, %v61
    %v76 = vmul.f32 %v74, %v74
    %v77 = vmul.f32 %v75, %v75
    %v78 = vmul.f32 %v76, %v76
    %v79 = vmul.f32 %v77, %v77
    %v80 = vsub.f32 1.0, %v68
    %v81 = vsub.f32 1.0, %v69
    %v82 = vmul.f32 %v80, %v80
    %v83 = vmul.f32 %v81, %v81
    %v84 = vsel %vm62, 1.0, %v78
    %v85 = vsel %vm63, 1.0, %v79
    %v86 = vmul.f32 %v82, %v84
    %v87 = vmul.f32 %v83, %v85
    %v88 = vmul.f32 %v71, %v86
    %v89 = vmul.f32 %v73, %v87
    %v90 = vsel %vm64, %v88, 0.0
    %v91 = vsel %vm65, %v89, 0.0
    %v92 = vsel %vm62, 1, 0
    %v93 = vsel %vm63, 1, 0
    %v94 = vcvt.s32.f32 %v92
    %v95 = vcvt.s32.f32 %v93
    %v96 = vadd.f32 %v90, %v91
    %v97 = vadd.f32 %v96, 0.0
    %v98 = vadd.f32 %v94, %v95
    %v99 = vadd.f32 %v98, 0.0
    %v100 = vld [vmem:[#allocation7] sm:$0xff]
    %v101 = vadd.f32 %v100, %v97
    %102 = vst [vmem:[#allocation7] sm:$0xff] %v101
    %s103 = scalar_lea.vmem [#allocation7], 8
    %v104 = vld [vmem:[%s103] sm:$0xff]
    %v105 = vadd.f32 %v104, %v99
    %106 = vst [vmem:[%s103] sm:$0xff] %v105
    // Predicated region
    $region22: #{tpu_custom_call.1} parent=1 // pred_check
      _
    $region23: #{tpu_custom_call.1} parent=1 // pred_check_branch
      %108 = sbr.rel (0) target = $region25
    $region24: #{tpu_custom_call.1} parent=1 // pred_region
      %s110 = ssub.s32 256, 256
      %111 = vsyncadd [#allocation4], %s110
      %s112 = sshll.u32 [#allocation7], 4
      %s113 = int_to_ptr.vmem [resolvable:$true] %s112
      %118 = dma.vmem_to_hbm [thread:$0]  %s113, 256, %s2, [#allocation4], 128, 128, 8
    $region25: #{tpu_custom_call.1} parent=1 // pred_fallthru
      _
    // Predicated region
    $region26: #{tpu_custom_call.1} parent=1 // pred_check
      _
    $region27: #{tpu_custom_call.1} parent=1 // pred_check_branch
      %120 = sbr.rel (0) target = $region29
    $region28: #{tpu_custom_call.1} parent=1 // pred_region
      %121 = dma.done [#allocation4], 256
    $region29: #{tpu_custom_call.1} parent=1 // pred_fallthru
      _
    %122 = vsyncpa [#allocation3], 1
    %123 = vsyncpa [#allocation6], 1
    %124 = vsyncpa [#allocation4], 1

</llo_original>
